<compile_context>
chip_gen: v6e
topology: v6e:2x2x1
jax: 0.10.0
libtpu: 0.0.40
codegen_flags: <defaults>
</compile_context>

<pallas_src>
import functools

import jax
import jax.numpy as jnp
from jax.experimental import pallas as pl
from jax.experimental.pallas import tpu as pltpu

LN_EPS = 1e-5  # torch.nn.LayerNorm default


def _round_up(x: int, m: int) -> int:
    return ((x + m - 1) // m) * m


def _sublane_multiple(dtype) -> int:
    # f32 -> 8, bf16 -> 16, int8/fp8 -> 32 (keeps vreg packing / DMA unmasked).
    itemsize = jnp.dtype(dtype).itemsize
    return max(8, 32 // max(itemsize, 1))


# ---------------------------------------------------------------------------
# Kernel
# ---------------------------------------------------------------------------
def _prediction_kernel(state_ref, ln_w_ref, ln_b_ref, w_ref, b_ref, out_ref,
                       normed_ref, *, n_axis: int, cache_ln: bool):
    def compute_ln():
        # Two-pass LayerNorm stats in f32 (matches torch, avoids cancellation).
        x = state_ref[...].astype(jnp.float32)                 # (TB, D)
        inv_d = 1.0 / x.shape[-1]
        mean = jnp.sum(x, axis=-1, keepdims=True) * inv_d
        centered = x - mean
        var = jnp.sum(centered * centered, axis=-1, keepdims=True) * inv_d
        inv_std = jax.lax.rsqrt(var + LN_EPS)
        normed = centered * inv_std * ln_w_ref[...] + ln_b_ref[...]
        # Store in the weight dtype so the MXU sees matching (e.g. bf16) operands.
        normed_ref[...] = normed.astype(normed_ref.dtype)

    if cache_ln:
        # N axis is the inner grid axis: the batch tile (and its LN) is valid
        # across all N tiles, so compute it once per batch tile.
        @pl.when(pl.program_id(n_axis) == 0)
        def _():
            compute_ln()
    else:
        compute_ln()

    # Fused policy+value head: one lane-dense matmul, f32 accumulation.
    out = jnp.dot(normed_ref[...], w_ref[...],
                  preferred_element_type=jnp.float32) + b_ref[...]
    out_ref[...] = out.astype(out_ref.dtype)


# ---------------------------------------------------------------------------
# Parameter preparation (run ONCE at setup time, not per call)
# ---------------------------------------------------------------------------
def prepare_prediction_params(ln_w, ln_b, wp, bp, wv, bv, *, weights_dtype=None):
    """Fuse + lane-pad the two head weights once. weights_dtype=jnp.bfloat16 enables
    the bf16 MXU path (f32 accumulation is kept inside the kernel)."""
    D = ln_w.shape[0]
    A = wp.shape[1]
    V = wv.shape[1]
    N = A + V
    n_pad = _round_up(N, 128)
    if weights_dtype is None:
        weights_dtype = wp.dtype

    w_fused = jnp.concatenate(
        [wp.astype(weights_dtype), wv.astype(weights_dtype)], axis=1)     # (D, N)
    b_fused = jnp.concatenate([bp, bv], axis=0).astype(jnp.float32)       # (N,)
    if n_pad != N:
        w_fused = jnp.pad(w_fused, ((0, 0), (0, n_pad - N)))
        b_fused = jnp.pad(b_fused, ((0, n_pad - N),))

    return dict(
        ln_w=ln_w.reshape(1, D).astype(jnp.float32),
        ln_b=ln_b.reshape(1, D).astype(jnp.float32),
        w_fused=w_fused,                       # (D, n_pad)
        b_fused=b_fused.reshape(1, n_pad),     # (1, n_pad), f32
        action_vocab_size=A,
        value_dim=V,
    )


# ---------------------------------------------------------------------------
# Forward pass
# ---------------------------------------------------------------------------
@functools.partial(jax.jit, static_argnames=("action_vocab_size", "value_dim"))
def prediction_network(state, ln_w, ln_b, w_fused, b_fused, *,
                       action_vocab_size: int, value_dim: int):
    """state: (B, D). Returns (policy_logits (B, A), value_estimates squeezed)."""
    B, D = state.shape
    n_pad = w_fused.shape[1]
    A, V = action_vocab_size, value_dim

    state_itemsize = jnp.dtype(state.dtype).itemsize
    w_itemsize = jnp.dtype(w_fused.dtype).itemsize
    out_dtype = jnp.result_type(state.dtype, w_fused.dtype)

    # --- tile sizes -------------------------------------------------------
    sub = _sublane_multiple(state.dtype)
    TB = min(_round_up(B, sub), 256)

    # TN: a lane-dense (multiple of 128) tile that divides n_pad exactly -> no
    # per-call re-pad of the weight.
    if n_pad <= 512:
        TN = n_pad
    else:
        TN = 128
        for cand in (512, 384, 256):
            if n_pad % cand == 0:
                TN = cand
                break

    grid_b = pl.cdiv(B, TB)
    grid_n = n_pad // TN

    # v7x megacore: make sure a grid of (1, 1) gets split so both TCs have work.
    if grid_b == 1 and grid_n == 1:
        if TB % (2 * sub) == 0 and pl.cdiv(B, TB // 2) > 1:
            TB //= 2
        elif TN % 256 == 0:
            TN //= 2
        grid_b = pl.cdiv(B, TB)
        grid_n = n_pad // TN

    # --- grid order: re-stream the cheaper operand -------------------------
    # batch-outer re-reads the weight (grid_b - 1) extra times,
    # N-outer re-reads the state (grid_n - 1) extra times.
    weight_reread = D * n_pad * w_itemsize * (grid_b - 1)
    state_reread = B * D * state_itemsize * (grid_n - 1)
    batch_outer = (grid_n == 1) or (grid_b == 1) or (weight_reread <= state_reread)

    if batch_outer:
        grid = (grid_b, grid_n)
        n_axis, cache_ln = 1, True
        state_spec = pl.BlockSpec((TB, D), lambda i, j: (i, 0))
        ln_w_spec = pl.BlockSpec((1, D), lambda i, j: (0, 0))
        ln_b_spec = pl.BlockSpec((1, D), lambda i, j: (0, 0))
        w_spec = pl.BlockSpec((D, TN), lambda i, j: (0, j))
        b_spec = pl.BlockSpec((1, TN), lambda i, j: (0, j))
        out_spec = pl.BlockSpec((TB, TN), lambda i, j: (i, j))
        dim_sem = ("parallel", "arbitrary")   # LN scratch carried across j
    else:
        grid = (grid_n, grid_b)
        n_axis, cache_ln = 0, False
        state_spec = pl.BlockSpec((TB, D), lambda j, i: (i, 0))
        ln_w_spec = pl.BlockSpec((1, D), lambda j, i: (0, 0))
        ln_b_spec = pl.BlockSpec((1, D), lambda j, i: (0, 0))
        w_spec = pl.BlockSpec((D, TN), lambda j, i: (0, j))
        b_spec = pl.BlockSpec((1, TN), lambda j, i: (0, j))
        out_spec = pl.BlockSpec((TB, TN), lambda j, i: (i, j))
        dim_sem = ("parallel", "parallel")

    # --- VMEM budget (tight enough for v7x's 64 MiB) ------------------------
    tiles = 2 * (TB * D * state_itemsize
                 + D * TN * w_itemsize
                 + TB * TN * jnp.dtype(out_dtype).itemsize)     # double-buffered
    small_params = 2 * (2 * D * 4 + TN * 4)
    ln_tmp = 4 * TB * D * 4            # x / centered / centered^2 / normed, f32
    acc_tmp = TB * TN * 4              # f32 matmul result before cast
    scratch = TB * D * w_itemsize
    est = tiles + small_params + ln_tmp + acc_tmp + scratch
    vmem_limit = int(min(max(2 * est, 16 << 20), 40 << 20))

    out = pl.pallas_call(
        functools.partial(_prediction_kernel, n_axis=n_axis, cache_ln=cache_ln),
        out_shape=jax.ShapeDtypeStruct((B, n_pad), out_dtype),
        grid_spec=pltpu.PrefetchScalarGridSpec(
            num_scalar_prefetch=0,
            grid=grid,
            in_specs=[state_spec, ln_w_spec, ln_b_spec, w_spec, b_spec],
            out_specs=out_spec,
            scratch_shapes=[pltpu.VMEM((TB, D), w_fused.dtype)],
        ),
        compiler_params=pltpu.CompilerParams(
            dimension_semantics=dim_sem,
            vmem_limit_bytes=vmem_limit,
        ),
    )(state, ln_w, ln_b, w_fused, b_fused)

    policy = out[:, :A]
    value = out[:, A:A + V]
    if V == 1:                                # matches torch's .squeeze(-1)
        value = jnp.squeeze(value, axis=-1)
    return policy, value


def apply_prediction_network(state, params):
    return prediction_network(
        state, params["ln_w"], params["ln_b"], params["w_fused"], params["b_fused"],
        action_vocab_size=params["action_vocab_size"], value_dim=params["value_dim"])


# ---------------------------------------------------------------------------
# Reference + demo
# ---------------------------------------------------------------------------
def _init_params(key, state_dim, action_vocab_size, value_dim, dtype=jnp.float32):
    """LayerNorm: weight=1, bias=0. Linear: U(-1/sqrt(fan_in), 1/sqrt(fan_in))."""
    k1, k2, k3, k4 = jax.random.split(key, 4)
    bound = 1.0 / (state_dim ** 0.5)
    ln_w = jnp.ones((state_dim,), dtype)
    ln_b = jnp.zeros((state_dim,), dtype)
    wp = jax.random.uniform(k1, (state_dim, action_vocab_size), dtype, -bound, bound)
    bp = jax.random.uniform(k2, (action_vocab_size,), dtype, -bound, bound)
    wv = jax.random.uniform(k3, (state_dim, value_dim), dtype, -bound, bound)
    bv = jax.random.uniform(k4, (value_dim,), dtype, -bound, bound)
    return ln_w, ln_b, wp, bp, wv, bv


def _reference(state, ln_w, ln_b, wp, bp, wv, bv):
    x = state.astype(jnp.float32)
    mean = jnp.mean(x, axis=-1, keepdims=True)
    var = jnp.mean((x - mean) ** 2, axis=-1, keepdims=True)
    normed = ((x - mean) / jnp.sqrt(var + LN_EPS)
              * ln_w.astype(jnp.float32) + ln_b.astype(jnp.float32))
    policy = normed @ wp.astype(jnp.float32) + bp.astype(jnp.float32)
    value = normed @ wv.astype(jnp.float32) + bv.astype(jnp.float32)
    value = jnp.squeeze(value, axis=-1) if value.shape[-1] == 1 else value
    return policy, value


def _check(batch, state_dim, action_vocab, value_dim, *, weights_dtype=None,
           atol=1e-4, rtol=1e-4, seed=0):
    key = jax.random.PRNGKey(seed)
    k_state, k_params = jax.random.split(key)
    state = jax.random.normal(k_state, (batch, state_dim), jnp.float32)
    raw = _init_params(k_params, state_dim, action_vocab, value_dim)
    params = prepare_prediction_params(*raw, weights_dtype=weights_dtype)

    policy, value = apply_prediction_network(state, params)
    jax.block_until_ready((policy, value))

    if weights_dtype is not None:
        ln_w, ln_b, wp, bp, wv, bv = raw
        raw = (ln_w, ln_b, wp.astype(weights_dtype), bp,
               wv.astype(weights_dtype), bv)
    ref_policy, ref_value = _reference(state, *raw)

    assert policy.shape == (batch, action_vocab)
    assert value.shape == ((batch,) if value_dim == 1 else (batch, value_dim))
    assert jnp.allclose(policy.astype(jnp.float32), ref_policy, atol=atol, rtol=rtol)
    assert jnp.allclose(value.astype(jnp.float32), ref_value, atol=atol, rtol=rtol)


if __name__ == "__main__":
    # TODO(synk): the torch module's debug print of the state shape is intentionally
    # not replicated inside the kernel.

    # 1) Small demo shapes (module-like): grid (1,1), f32 path, tight tolerance.
    _check(batch=8, state_dim=32, action_vocab=16, value_dim=1, seed=0)

    # 2) Larger shapes: ragged batch tile, multiple N tiles, swapped grid order.
    _check(batch=272, state_dim=256, action_vocab=700, value_dim=1,
           atol=1e-3, rtol=1e-3, seed=1)

    # 3) bf16 fused-weight path with LN caching across N tiles (batch-outer grid).
    _check(batch=16, state_dim=64, action_vocab=700, value_dim=1,
           weights_dtype=jnp.bfloat16, atol=2e-2, rtol=2e-2, seed=2)

    print("KERNEL_OK")
</pallas_src>

<mosaic_0001>
module attributes {stable_mosaic.version = 11 : i64} {
  func.func @_prediction_kernel(%arg0: i32, %arg1: i32, %arg2: memref<8x32xf32, #tpu.memory_space<vmem>>, %arg3: memref<1x32xf32, #tpu.memory_space<vmem>>, %arg4: memref<1x32xf32, #tpu.memory_space<vmem>>, %arg5: memref<32x128xf32, #tpu.memory_space<vmem>>, %arg6: memref<1x128xf32, #tpu.memory_space<vmem>>, %arg7: memref<8x128xf32, #tpu.memory_space<vmem>>, %arg8: memref<8x32xf32, #tpu.memory_space<vmem>>) attributes {dimension_semantics = [#tpu.dimension_semantics<parallel>, #tpu.dimension_semantics<arbitrary>], iteration_bounds = array<i64: 1, 1>, scalar_prefetch = 0 : i64, scratch_operands = 1 : i64, tpu.core_type = #tpu.core_type<tc>, window_params = [{transform_indices = @transform_0, window_bounds = array<i64: 8, 32>}, {pipeline_mode = #tpu.pipeline_mode<synchronous>, transform_indices = @transform_1, window_bounds = array<i64: 1, 32>}, {pipeline_mode = #tpu.pipeline_mode<synchronous>, transform_indices = @transform_2, window_bounds = array<i64: 1, 32>}, {transform_indices = @transform_3, window_bounds = array<i64: 32, 128>}, {transform_indices = @transform_4, window_bounds = array<i64: 1, 128>}, {transform_indices = @transform_5, window_bounds = array<i64: 8, 128>}]} {
    %c0_i32 = arith.constant 0 : i32
    %0 = arith.cmpi eq, %arg1, %c0_i32 : i32
    %1 = arith.extui %0 : i1 to i32
    %c0_i32_0 = arith.constant 0 : i32
    %2 = arith.cmpi ne, %1, %c0_i32_0 : i32
    scf.if %2 {
      %c0_8 = arith.constant 0 : index
      %c0_9 = arith.constant 0 : index
      %10 = vector.load %arg2[%c0_8, %c0_9] : memref<8x32xf32, #tpu.memory_space<vmem>>, vector<8x32xf32>
      %cst_10 = arith.constant dense<0.000000e+00> : vector<8xf32>
      %11 = vector.multi_reduction <add>, %10, %cst_10 [1] : vector<8x32xf32> to vector<8xf32>
      %12 = vector.shape_cast %11 : vector<8xf32> to vector<8x1xf32>
      %cst_11 = arith.constant 3.125000e-02 : f32
      %13 = vector.broadcast %cst_11 : f32 to vector<8x1xf32>
      %14 = arith.mulf %12, %13 : vector<8x1xf32>
      %15 = vector.broadcast %14 : vector<8x1xf32> to vector<8x32xf32>
      %16 = arith.subf %10, %15 : vector<8x32xf32>
      %17 = arith.mulf %16, %16 : vector<8x32xf32>
      %cst_12 = arith.constant dense<0.000000e+00> : vector<8xf32>
      %18 = vector.multi_reduction <add>, %17, %cst_12 [1] : vector<8x32xf32> to vector<8xf32>
      %19 = vector.shape_cast %18 : vector<8xf32> to vector<8x1xf32>
      %cst_13 = arith.constant 3.125000e-02 : f32
      %20 = vector.broadcast %cst_13 : f32 to vector<8x1xf32>
      %21 = arith.mulf %19, %20 : vector<8x1xf32>
      %cst_14 = arith.constant 9.99999974E-6 : f32
      %22 = vector.broadcast %cst_14 : f32 to vector<8x1xf32>
      %23 = arith.addf %21, %22 : vector<8x1xf32>
      %24 = math.rsqrt %23 : vector<8x1xf32>
      %25 = vector.broadcast %24 : vector<8x1xf32> to vector<8x32xf32>
      %26 = arith.mulf %16, %25 : vector<8x32xf32>
      %c0_15 = arith.constant 0 : index
      %c0_16 = arith.constant 0 : index
      %27 = vector.load %arg3[%c0_15, %c0_16] : memref<1x32xf32, #tpu.memory_space<vmem>>, vector<1x32xf32>
      %28 = vector.broadcast %27 : vector<1x32xf32> to vector<8x32xf32>
      %29 = arith.mulf %26, %28 : vector<8x32xf32>
      %c0_17 = arith.constant 0 : index
      %c0_18 = arith.constant 0 : index
      %30 = vector.load %arg4[%c0_17, %c0_18] : memref<1x32xf32, #tpu.memory_space<vmem>>, vector<1x32xf32>
      %31 = vector.broadcast %30 : vector<1x32xf32> to vector<8x32xf32>
      %32 = arith.addf %29, %31 : vector<8x32xf32>
      %c0_19 = arith.constant 0 : index
      %c0_20 = arith.constant 0 : index
      %33 = vector.load %arg8[%c0_19, %c0_20] : memref<8x32xf32, #tpu.memory_space<vmem>>, vector<8x32xf32>
      tpu.vector_store %arg8[%c0_19, %c0_20], %32 {strides = array<i32>} : memref<8x32xf32, #tpu.memory_space<vmem>>, vector<8x32xf32>,
    } else {
    }
    %c0 = arith.constant 0 : index
    %c0_1 = arith.constant 0 : index
    %3 = vector.load %arg8[%c0, %c0_1] : memref<8x32xf32, #tpu.memory_space<vmem>>, vector<8x32xf32>
    %c0_2 = arith.constant 0 : index
    %c0_3 = arith.constant 0 : index
    %4 = vector.load %arg5[%c0_2, %c0_3] : memref<32x128xf32, #tpu.memory_space<vmem>>, vector<32x128xf32>
    %cst = arith.constant dense<0.000000e+00> : vector<8x128xf32>
    %5 = tpu.matmul %3, %4, %cst {dimension_numbers = #tpu.dot_dimension_numbers<[1], [0], [0], [1], [0, 0, 1, 1], [], []>} : vector<8x32xf32>, vector<32x128xf32>, vector<8x128xf32> -> vector<8x128xf32>
    %c0_4 = arith.constant 0 : index
    %c0_5 = arith.constant 0 : index
    %6 = vector.load %arg6[%c0_4, %c0_5] : memref<1x128xf32, #tpu.memory_space<vmem>>, vector<1x128xf32>
    %7 = vector.broadcast %6 : vector<1x128xf32> to vector<8x128xf32>
    %8 = arith.addf %5, %7 : vector<8x128xf32>
    %c0_6 = arith.constant 0 : index
    %c0_7 = arith.constant 0 : index
    %9 = vector.load %arg7[%c0_6, %c0_7] : memref<8x128xf32, #tpu.memory_space<vmem>>, vector<8x128xf32>
    tpu.vector_store %arg7[%c0_6, %c0_7], %8 {strides = array<i32>} : memref<8x128xf32, #tpu.memory_space<vmem>>, vector<8x128xf32>,
    return
  }
  func.func @transform_0(%arg0: i32, %arg1: i32) -> (i32, i32) {
    %c0_i32 = arith.constant 0 : i32
    %c0_i32_0 = arith.constant 0 : i32
    return %arg0, %c0_i32 : i32, i32
  }
  func.func @transform_1(%arg0: i32, %arg1: i32) -> (i32, i32) {
    %c0_i32 = arith.constant 0 : i32
    %c0_i32_0 = arith.constant 0 : i32
    %c0_i32_1 = arith.constant 0 : i32
    return %c0_i32, %c0_i32_0 : i32, i32
  }
  func.func @transform_2(%arg0: i32, %arg1: i32) -> (i32, i32) {
    %c0_i32 = arith.constant 0 : i32
    %c0_i32_0 = arith.constant 0 : i32
    %c0_i32_1 = arith.constant 0 : i32
    return %c0_i32, %c0_i32_0 : i32, i32
  }
  func.func @transform_3(%arg0: i32, %arg1: i32) -> (i32, i32) {
    %c0_i32 = arith.constant 0 : i32
    %c0_i32_0 = arith.constant 0 : i32
    return %c0_i32, %arg1 : i32, i32
  }
  func.func @transform_4(%arg0: i32, %arg1: i32) -> (i32, i32) {
    %c0_i32 = arith.constant 0 : i32
    %c0_i32_0 = arith.constant 0 : i32
    return %c0_i32, %arg1 : i32, i32
  }
  func.func @transform_5(%arg0: i32, %arg1: i32) -> (i32, i32) {
    %c0_i32 = arith.constant 0 : i32
    return %arg0, %arg1 : i32, i32
  }
}

</mosaic_0001>

<llo_original>
// kernel: prediction_network.1
$region0: #{prediction_network.1}
  #allocation0 [shape = 'u32[]', space=smem, size = 0x4, offset = 0x4, fixed_abs, tag = 'smem constant byte address 0x4 - core index']
  #allocation1 [shape = 'u32[144,128]{1,0:T(1,128)}', space=vmem, size = 0x12000, scoped, tag = 'internal scratch']
  #allocation2 [shape = 'f32[8,32]{1,0:T(8,128)}', space=vmem, size = 0x1000, scoped, tag = 'scratch operand']
  %s0 = inlined_call_operand.hbm [shape: f32[8,32], index: 0, kind: input, shape index: {}]
  %s1 = inlined_call_operand.vmem [shape: f32[1,32], index: 1, kind: input, shape index: {}]
  %s2 = inlined_call_operand.vmem [shape: f32[1,32], index: 2, kind: input, shape index: {}]
  %s3 = inlined_call_operand.hbm [shape: f32[32,128], index: 3, kind: input, shape index: {}]
  %s4 = inlined_call_operand.vmem [shape: f32[1,128], index: 4, kind: input, shape index: {}]
  %s5 = inlined_call_operand.vmem [shape: f32[8,128], index: 5, kind: output, shape index: {}]
  %s6 = sld [smem:[#allocation0]]
  $region42: #{prediction_network.1} parent=0
    _
  %s8 = ssub.s32 1, %s6
  %s9 = scalar_select 0, %s8, %s6
  $region1: #{prediction_network.1} parent=0
    #allocation3 [shape = 'u8[4096]{0}', space=vmem, size = 0x1000, scoped, tag = 'input window, operand 0, single buffered']
    #allocation4 [shape = 's32[1]{0}', space=sflag, size = 0x4, scoped, tag = 'scoped memory for prediction_network.1']
    #allocation5 [shape = 'u8[16384]{0}', space=vmem, size = 0x4000, scoped, tag = 'input window, operand 3, single buffered']
    #allocation6 [shape = 's32[1]{0}', space=sflag, size = 0x4, scoped, tag = 'scoped memory for prediction_network.1']
    %10 = vsyncpa [#allocation4], 0
    %11 = vsyncpa [#allocation6], 0
    // Predicated region
    $region2: #{prediction_network.1} parent=1 // pred_check
      _
    $region3: #{prediction_network.1} parent=1 // pred_check_branch
      %13 = sbr.rel (0) target = $region5
    $region4: #{prediction_network.1} parent=1 // pred_region
      %s15 = ssub.s32 128, 128
      %16 = vsyncadd [#allocation4], %s15
      %s18 = sshll.u32 [#allocation3], 4
      %s19 = int_to_ptr.vmem [resolvable:$true] %s18
      %21 = dma.hbm_to_vmem [thread:$0]  %s0, 128, %s19, [#allocation4]
    $region5: #{prediction_network.1} parent=1 // pred_fallthru
      _
    // Predicated region
    $region6: #{prediction_network.1} parent=1 // pred_check
      _
    $region7: #{prediction_network.1} parent=1 // pred_check_branch
      %23 = sbr.rel (0) target = $region9
    $region8: #{prediction_network.1} parent=1 // pred_region
      _
    $region9: #{prediction_network.1} parent=1 // pred_fallthru
      _
    // Predicated region
    $region10: #{prediction_network.1} parent=1 // pred_check
      _
    $region11: #{prediction_network.1} parent=1 // pred_check_branch
      %25 = sbr.rel (0) target = $region13
    $region12: #{prediction_network.1} parent=1 // pred_region
      _
    $region13: #{prediction_network.1} parent=1 // pred_fallthru
      _
    // Predicated region
    $region14: #{prediction_network.1} parent=1 // pred_check
      _
    $region15: #{prediction_network.1} parent=1 // pred_check_branch
      %27 = sbr.rel (0) target = $region17
    $region16: #{prediction_network.1} parent=1 // pred_region
      %s29 = ssub.s32 512, 512
      %30 = vsyncadd [#allocation6], %s29
      %s31 = sshll.u32 [#allocation5], 4
      %s32 = int_to_ptr.vmem [resolvable:$true] %s31
      %37 = dma.hbm_to_vmem [thread:$0]  %s3, 512, %s32, [#allocation6], 128, 128, 8
    $region17: #{prediction_network.1} parent=1 // pred_fallthru
      _
    // Predicated region
    $region18: #{prediction_network.1} parent=1 // pred_check
      _
    $region19: #{prediction_network.1} parent=1 // pred_check_branch
      %39 = sbr.rel (0) target = $region21
    $region20: #{prediction_network.1} parent=1 // pred_region
      _
    $region21: #{prediction_network.1} parent=1 // pred_fallthru
      _
    // Predicated region
    $region22: #{prediction_network.1} parent=1 // pred_check
      _
    $region23: #{prediction_network.1} parent=1 // pred_check_branch
      %41 = sbr.rel (0) target = $region25
    $region24: #{prediction_network.1} parent=1 // pred_region
      %42 = dma.done [#allocation4], 128
    $region25: #{prediction_network.1} parent=1 // pred_fallthru
      _
    // Predicated region
    $region26: #{prediction_network.1} parent=1 // pred_check
      _
    $region27: #{prediction_network.1} parent=1 // pred_check_branch
      %44 = sbr.rel (0) target = $region29
    $region28: #{prediction_network.1} parent=1 // pred_region
      %45 = dma.done [#allocation6], 512
    $region29: #{prediction_network.1} parent=1 // pred_fallthru
      _
    %p46 = scmp.eq.s32.totalorder 0, 0
    // Predicated region
    $region30: #{prediction_network.1} parent=1 // pred_check
      %p47 = pneg %p46
    $region31: #{prediction_network.1} parent=1 // pred_check_branch
      %49 = sbr.rel (%p47) target = $region33
    $region32: #{prediction_network.1} parent=1 // pred_region
      %v50 = vld [vmem:[#allocation3] sm:$0xff]
      %vm51 = vcmask 261120
      %v52 = vsel %vm51, %v50, 0.0
      %53 = vadd.xlane.f32.xlu0 %v52
      %v54 = vpop.xlane.xlu0 %53
      %v55 = vmul.f32 %v54, 0.03125
      %v56 = vsub.f32 %v50, %v55
      %v57 = vmul.f32 %v56, %v56
      %v58 = vsel %vm51, %v57, 0.0
      %59 = vadd.xlane.f32.xlu0 %v58
      %v60 = vpop.xlane.xlu0 %59
      %v61 = vmul.f32 %v60, 0.03125
      %v62 = vadd.f32 %v61, 1e-05
      %v63 = vrsqrt.pop %v62
      %v64 = vmul.f32 %v56, %v63
      %v65 = vld [vmem:[%s1] sm:$0x1]
      %v67 = vlaneseq
      %v68 = vshrl.u32 %v67, 7
      %v69 = vsub.s32 0, %v68
      %v70 = vrot.slane %v65, %v69
      %v72 = vmul.f32 %v64, %v70
      %v73 = vld [vmem:[%s2] sm:$0x1]
      %v75 = vlaneseq
      %v76 = vshrl.u32 %v75, 7
      %v77 = vsub.s32 0, %v76
      %v78 = vrot.slane %v73, %v77
      %v80 = vadd.f32 %v72, %v78
      %81 = vst.msk [vmem:[#allocation2] sm:$0xff] %vm51, %v80
    $region33: #{prediction_network.1} parent=1 // pred_fallthru
      _
    %v82 = vld [vmem:[#allocation2] sm:$0xff]
    %v83 = vld [vmem:[#allocation5] sm:$0xff]
    %v84 = vld [vmem:[#allocation5 + $0x8] sm:$0xff]
    %v85 = vld [vmem:[#allocation5 + $0x10] sm:$0xff]
    %v86 = vld [vmem:[#allocation5 + $0x18] sm:$0xff]
    %v87 = vld [vmem:[%s4] sm:$0x1]
    %v89 = vlaneseq
    %v90 = vshrl.u32 %v89, 7
    %v91 = vsub.s32 0, %v90
    %v92 = vrot.slane %v87, %v91
    %vm94 = vcmask 261120
    %v96 = vsel %vm94, %v82, 0
    %98 = vmatprep.subr.mxu0 0.0
    %99 = vmatpush1.msra.mxu0 0.0
    %100 = vmatprep.subr.mxu0 0.0
    %101 = vmatpush1.msra.mxu0 0.0
    %102 = vmatprep.subr.mxu0 0.0
    %103 = vmatpush1.msra.mxu0 0.0
    %104 = vmatprep.subr.mxu0 0.0
    %105 = vmatpush1.msra.mxu0 0.0
    %106 = vmatprep.subr.mxu0 0.0
    %107 = vmatpush1.msra.mxu0 0.0
    %108 = vmatprep.subr.mxu0 0.0
    %109 = vmatpush1.msra.mxu0 0.0
    %110 = vmatprep.subr.mxu0 0.0
    %111 = vmatpush1.msra.mxu0 0.0
    %112 = vmatprep.subr.mxu0 0.0
    %113 = vmatpush1.msra.mxu0 0.0
    %114 = vmatprep.subr.mxu0 0.0
    %115 = vmatpush1.msra.mxu0 0.0
    %116 = vmatprep.subr.mxu0 0.0
    %117 = vmatpush1.msra.mxu0 0.0
    %118 = vmatprep.subr.mxu0 0.0
    %119 = vmatpush1.msra.mxu0 0.0
    %120 = vmatprep.subr.mxu0 0.0
    %121 = vmatpush1.msra.mxu0 0.0
    %122 = vmatprep.subr.mxu0 0.0
    %123 = vmatpush1.msra.mxu0 %v86
    %124 = vmatprep.subr.mxu0 0.0
    %125 = vmatpush1.msra.mxu0 %v85
    %126 = vmatprep.subr.mxu0 0.0
    %127 = vmatpush1.msra.mxu0 %v84
    %128 = vmatprep.subr.mxu0 0.0
    %129 = vmatpush1.msra.mxu0 %v83
    %130 = vmatprep.subr.mxu0 0.0
    %131 = vmatpush2.msra.mxu0 0.0
    %132 = vmatprep.subr.mxu0 0.0
    %133 = vmatpush2.msra.mxu0 0.0
    %134 = vmatprep.subr.mxu0 0.0
    %135 = vmatpush2.msra.mxu0 0.0
    %136 = vmatprep.subr.mxu0 0.0
    %137 = vmatpush2.msra.mxu0 0.0
    %138 = vmatprep.subr.mxu0 0.0
    %139 = vmatpush2.msra.mxu0 0.0
    %140 = vmatprep.subr.mxu0 0.0
    %141 = vmatpush2.msra.mxu0 0.0
    %142 = vmatprep.subr.mxu0 0.0
    %143 = vmatpush2.msra.mxu0 0.0
    %144 = vmatprep.subr.mxu0 0.0
    %145 = vmatpush2.msra.mxu0 0.0
    %146 = vmatprep.subr.mxu0 0.0
    %147 = vmatpush2.msra.mxu0 0.0
    %148 = vmatprep.subr.mxu0 0.0
    %149 = vmatpush2.msra.mxu0 0.0
    %150 = vmatprep.subr.mxu0 0.0
    %151 = vmatpush2.msra.mxu0 0.0
    %152 = vmatprep.subr.mxu0 0.0
    %153 = vmatpush2.msra.mxu0 0.0
    %154 = vmatprep.subr.mxu0 0.0
    %155 = vmatpush2.msra.mxu0 0.0
    %156 = vmatprep.subr.mxu0 0.0
    %157 = vmatpush2.msra.mxu0 0.0
    %158 = vmatprep.subr.mxu0 0.0
    %159 = vmatpush2.msra.mxu0 0.0
    %160 = vmatprep.subr.mxu0 0.0
    %161 = vmatpush2.msra.mxu0 0.0
    %162 = vmatprep.mubr.f32.mxu0 0.0
    %163 = vmatmul.mubr.f32.gmra.mxu0 %v96
    %v164 = vpop.f32.mrf.mxu0
    %v165 = vadd.f32 %v92, %v164
    %v166 = vpop.f32.mrf.mxu0
    %167 = vdwg.mxu0
    %168 = vst [vmem:[%s5] sm:$0xff] %v165
    // Predicated region
    $region34: #{prediction_network.1} parent=1 // pred_check
      _
    $region35: #{prediction_network.1} parent=1 // pred_check_branch
      %170 = sbr.rel (0) target = $region37
    $region36: #{prediction_network.1} parent=1 // pred_region
      _
    $region37: #{prediction_network.1} parent=1 // pred_fallthru
      _
    // Predicated region
    $region38: #{prediction_network.1} parent=1 // pred_check
      _
    $region39: #{prediction_network.1} parent=1 // pred_check_branch
      %172 = sbr.rel (0) target = $region41
    $region40: #{prediction_network.1} parent=1 // pred_region
      _
    $region41: #{prediction_network.1} parent=1 // pred_fallthru
      _
    %173 = vsyncpa [#allocation4], 1
    %174 = vsyncpa [#allocation6], 1

</llo_original>
